<compile_context>
chip_gen: v6e
topology: v6e:2x2x1
jax: 0.10.0
libtpu: 0.0.40
codegen_flags: <defaults>
</compile_context>

<pallas_src>
import jax
import jax.numpy as jnp
from jax.experimental import pallas as pl
from jax.experimental.pallas import tpu as pltpu


def _bypass_copy_kernel(y_ref, o_ref):
    # Identity: copy the current tile through VMEM (purely DMA-bound).
    o_ref[...] = y_ref[...]


def _choose_2d_factorization(n_elem, last_dim):
    """Pick a lane-dense (rows, cols) view of the flat array with no padding.

    Prefers a wide, 128-multiple column count (unmasked `vst`, full-lane DMA);
    falls back to the original trailing dim (always divides n_elem), where the
    block covers the full width so the (8,128) constraint is satisfied via the
    "block dim == full array dim" rule.
    """
    for c in (32768, 16384, 8192, 4096, 2048, 1024, 512, 256, 128):
        if n_elem % c == 0:
            return n_elem // c, c
    c = max(1, last_dim)
    return n_elem // c, c


def _identity_pallas(Y, *, alias_output=False):
    orig_shape = Y.shape
    n_elem = Y.size
    if n_elem == 0:
        return Y

    last_dim = orig_shape[-1] if Y.ndim >= 1 else 1
    R, C = _choose_2d_factorization(n_elem, last_dim)
    y2d = Y.reshape(R, C)  # metadata-only reshape: no pad, no extra HBM copy

    # Target ~2 MiB blocks.  With 2 operands x 2 (double-buffer) that is
    # ~8 MiB of VMEM, well under the default scoped limit on every generation.
    itemsize = jnp.dtype(Y.dtype).itemsize
    bytes_per_row = C * itemsize
    target_rows = max(1, (2 * 1024 * 1024) // bytes_per_row)
    if target_rows >= R or R <= 8:
        block_r = R  # full extent (also covers small inputs / R < 8)
    else:
        block_r = max(8, (min(target_rows, R) // 8) * 8)  # multiple of 8

    grid = (pl.cdiv(R, block_r),)  # ragged last block handled by Pallas

    out2d = pl.pallas_call(
        _bypass_copy_kernel,
        out_shape=jax.ShapeDtypeStruct((R, C), Y.dtype),
        grid=grid,
        in_specs=[pl.BlockSpec((block_r, C), lambda i: (i, 0))],
        out_specs=pl.BlockSpec((block_r, C), lambda i: (i, 0)),
        compiler_params=pltpu.CompilerParams(
            dimension_semantics=("parallel",)
        ),
        # Only alias when the caller can donate Y; otherwise XLA would insert
        # a defensive copy and double the HBM traffic.
        input_output_aliases={0: 0} if alias_output else {},
    )(y2d)
    return out2d.reshape(orig_shape)


def bypass_forward(Y, *args, return_interference=False, use_kernel=False,
                   alias_output=False, **kwargs):
    """JAX/Pallas equivalent of Bypass.forward.

    Default (use_kernel=False): zero-cost passthrough — no kernel, no HBM
    traffic, exactly matching the PyTorch module's semantics.
    use_kernel=True: runs the tuned Pallas identity-copy kernel instead.
    """
    if use_kernel:
        out = _identity_pallas(Y, alias_output=alias_output)
    else:
        out = Y

    if return_interference:
        return (out, out)
    return (out, None)


if __name__ == "__main__":
    key = jax.random.PRNGKey(0)
    # Small NCHW input consistent with a conv-backbone interface.
    Y = jax.random.normal(key, (2, 4, 16, 16), dtype=jnp.float32)

    # 1) Preferred free path (no kernel launched) — matches PyTorch semantics.
    out, interf = bypass_forward(Y, return_interference=False)
    out = jax.block_until_ready(out)
    assert interf is None
    assert out.shape == Y.shape and out.dtype == Y.dtype
    assert bool(jnp.all(out == Y))

    # 2) Pallas kernel path (identity copy), run once and verified.
    out_k, interf_k = bypass_forward(Y, return_interference=True, use_kernel=True)
    out_k = jax.block_until_ready(out_k)
    interf_k = jax.block_until_ready(interf_k)
    assert out_k.shape == Y.shape and out_k.dtype == Y.dtype
    assert bool(jnp.all(out_k == Y)) and bool(jnp.all(interf_k == Y))

    # 3) Kernel path on a shape whose element count is NOT a multiple of 128
    #    (exercises the no-pad fallback factorization), in bfloat16.
    Y2 = jax.random.normal(key, (2, 3, 7, 5), dtype=jnp.bfloat16)
    out2, _ = bypass_forward(Y2, use_kernel=True)
    out2 = jax.block_until_ready(out2)
    assert out2.shape == Y2.shape and out2.dtype == Y2.dtype
    assert bool(jnp.all(out2 == Y2))

    # 4) Larger lane-dense shape to exercise the multi-block tiled path.
    Y3 = jax.random.normal(key, (8, 32, 32, 128), dtype=jnp.float32)
    out3, _ = bypass_forward(Y3, use_kernel=True)
    out3 = jax.block_until_ready(out3)
    assert out3.shape == Y3.shape and out3.dtype == Y3.dtype
    assert bool(jnp.all(out3 == Y3))

    print("KERNEL_OK")
</pallas_src>

<mosaic_0001>
module attributes {stable_mosaic.version = 11 : i64} {
  func.func @_bypass_copy_kernel(%arg0: i32, %arg1: memref<1x2048xf32, #tpu.memory_space<vmem>>, %arg2: memref<1x2048xf32, #tpu.memory_space<vmem>>) attributes {dimension_semantics = [#tpu.dimension_semantics<parallel>], iteration_bounds = array<i64: 1>, scalar_prefetch = 0 : i64, scratch_operands = 0 : i64, tpu.core_type = #tpu.core_type<tc>, window_params = [{transform_indices = @transform_0, window_bounds = array<i64: 1, 2048>}, {transform_indices = @transform_1, window_bounds = array<i64: 1, 2048>}]} {
    %c0 = arith.constant 0 : index
    %c0_0 = arith.constant 0 : index
    %0 = vector.load %arg1[%c0, %c0_0] : memref<1x2048xf32, #tpu.memory_space<vmem>>, vector<1x2048xf32>
    %c0_1 = arith.constant 0 : index
    %c0_2 = arith.constant 0 : index
    %1 = vector.load %arg2[%c0_1, %c0_2] : memref<1x2048xf32, #tpu.memory_space<vmem>>, vector<1x2048xf32>
    tpu.vector_store %arg2[%c0_1, %c0_2], %0 {strides = array<i32>} : memref<1x2048xf32, #tpu.memory_space<vmem>>, vector<1x2048xf32>,
    return
  }
  func.func @transform_0(%arg0: i32) -> (i32, i32) {
    %c0_i32 = arith.constant 0 : i32
    %c0_i32_0 = arith.constant 0 : i32
    return %arg0, %c0_i32 : i32, i32
  }
  func.func @transform_1(%arg0: i32) -> (i32, i32) {
    %c0_i32 = arith.constant 0 : i32
    %c0_i32_0 = arith.constant 0 : i32
    return %arg0, %c0_i32 : i32, i32
  }
}

</mosaic_0001>

<llo_original>
// kernel: tpu_custom_call.1
$region0: #{tpu_custom_call.1}
  #allocation0 [shape = 'u32[]', space=smem, size = 0x4, offset = 0x4, fixed_abs, tag = 'smem constant byte address 0x4 - core index']
  #allocation1 [shape = 'u32[144,128]{1,0:T(1,128)}', space=vmem, size = 0x12000, scoped, tag = 'internal scratch']
  %s0 = inlined_call_operand.hbm [shape: f32[1,2048], index: 0, kind: input, shape index: {}]
  %s1 = inlined_call_operand.hbm [shape: f32[1,2048], index: 1, kind: output, shape index: {}]
  %s2 = sld [smem:[#allocation0]]
  $region18: #{tpu_custom_call.1} parent=0
    _
  %s4 = ssub.s32 1, %s2
  %s5 = scalar_select 0, %s4, %s2
  $region1: #{tpu_custom_call.1} parent=0
    #allocation2 [shape = 'u8[8192]{0}', space=vmem, size = 0x2000, scoped, tag = 'input window, operand 0, single buffered']
    #allocation3 [shape = 's32[1]{0}', space=sflag, size = 0x4, scoped, tag = 'scoped memory for tpu_custom_call.1']
    #allocation4 [shape = 's32[1]{0}', space=sflag, size = 0x4, scoped, tag = 'scoped memory for tpu_custom_call.1']
    #allocation5 [shape = 'u8[8192]{0}', space=vmem, size = 0x2000, scoped, tag = 'output window, operand 0, single buffered']
    %6 = vsyncpa [#allocation3], 0
    %7 = vsyncpa [#allocation4], 0
    // Predicated region
    $region2: #{tpu_custom_call.1} parent=1 // pred_check
      _
    $region3: #{tpu_custom_call.1} parent=1 // pred_check_branch
      %9 = sbr.rel (0) target = $region5
    $region4: #{tpu_custom_call.1} parent=1 // pred_region
      %s11 = ssub.s32 256, 256
      %12 = vsyncadd [#allocation3], %s11
      %s14 = sshll.u32 [#allocation2], 4
      %s15 = int_to_ptr.vmem [resolvable:$true] %s14
      %17 = dma.hbm_to_vmem [thread:$0]  %s0, 256, %s15, [#allocation3]
    $region5: #{tpu_custom_call.1} parent=1 // pred_fallthru
      _
    // Predicated region
    $region6: #{tpu_custom_call.1} parent=1 // pred_check
      _
    $region7: #{tpu_custom_call.1} parent=1 // pred_check_branch
      %19 = sbr.rel (0) target = $region9
    $region8: #{tpu_custom_call.1} parent=1 // pred_region
      %20 = dma.done [#allocation3], 256
    $region9: #{tpu_custom_call.1} parent=1 // pred_fallthru
      _
    %v21 = vld [vmem:[#allocation2] sm:$0xff]
    %v22 = vld [vmem:[#allocation2 + $0x8] sm:$0xff]
    %23 = vst [vmem:[#allocation5] sm:$0xff] %v21
    %24 = vst [vmem:[#allocation5 + $0x8] sm:$0xff] %v22
    // Predicated region
    $region10: #{tpu_custom_call.1} parent=1 // pred_check
      _
    $region11: #{tpu_custom_call.1} parent=1 // pred_check_branch
      %26 = sbr.rel (0) target = $region13
    $region12: #{tpu_custom_call.1} parent=1 // pred_region
      %s28 = ssub.s32 256, 256
      %29 = vsyncadd [#allocation4], %s28
      %s31 = sshll.u32 [#allocation5], 4
      %s32 = int_to_ptr.vmem [resolvable:$true] %s31
      %34 = dma.vmem_to_hbm [thread:$0]  %s32, 256, %s1, [#allocation4]
    $region13: #{tpu_custom_call.1} parent=1 // pred_fallthru
      _
    // Predicated region
    $region14: #{tpu_custom_call.1} parent=1 // pred_check
      _
    $region15: #{tpu_custom_call.1} parent=1 // pred_check_branch
      %36 = sbr.rel (0) target = $region17
    $region16: #{tpu_custom_call.1} parent=1 // pred_region
      %37 = dma.done [#allocation4], 256
    $region17: #{tpu_custom_call.1} parent=1 // pred_fallthru
      _
    %38 = vsyncpa [#allocation3], 1
    %39 = vsyncpa [#allocation4], 1

</llo_original>
